<compile_context>
chip_gen: v7x
topology: tpu7x:2x2x1
jax: 0.10.0
libtpu: 0.0.40
codegen_flags: <defaults>
</compile_context>

<pallas_src>
import jax
import jax.numpy as jnp
from jax.experimental import pallas as pl
from jax.experimental.pallas import tpu as pltpu

LANE = 128
TM_MAX = 512                       # sublane rows per tile (~256 KiB per f32 tile)
VMEM_BUDGET = 20 * 1024 * 1024     # target live (double-buffered) VMEM


# ----------------------------------------------------------------------------
# Pallas kernel: (kr + i*ki) * (xr + i*xi), kernel spectrum broadcast over C.
# ----------------------------------------------------------------------------
def _cmul_kernel(kr_ref, ki_ref, xr_ref, xi_ref, or_ref, oi_ref):
    kr = kr_ref[...]            # (tm, 128)
    ki = ki_ref[...]
    xr = xr_ref[...]            # (cb, tm, 128)
    xi = xi_ref[...]
    # (a + ib)(c + id) = (ac - bd) + i(ad + bc)
    or_ref[...] = kr * xr - ki * xi
    oi_ref[...] = kr * xi + ki * xr


def _choose_tiles(C, n):
    """Tile selection for flattened length-n per-channel half spectra."""
    M_raw = -(-n // LANE)                       # ceil(n / 128) sublane rows
    if M_raw <= TM_MAX:
        nb_m, tm = 1, M_raw                     # full-dim block is always legal
    else:
        nb_m = -(-M_raw // TM_MAX)
        tm = -(-(-(-M_raw // nb_m)) // 8) * 8   # ceil(M_raw/nb_m) up to mult. of 8
    M = tm * nb_m

    tile_bytes = tm * LANE * 4
    # live VMEM ~= 2 (double buf) * (kr + ki + cb*(xr+xi+or+oi)) tiles
    cb_cap = max(1, (VMEM_BUDGET // (2 * tile_bytes) - 2) // 4)
    cb = 1
    for d in range(1, C + 1):                   # largest divisor of C <= cap
        if C % d == 0 and d <= cb_cap:
            cb = d
    nb_c = C // cb
    return tm, M, nb_m, cb, nb_c


def complex_mult_pallas(kr, ki, xr, xi):
    """kr, ki: (SX, SYH) f32; xr, xi: (C, SX, SYH) f32 -> (pr, pi) same shapes."""
    C, SX, SYH = xr.shape
    n = SX * SYH
    tm, M, nb_m, cb, nb_c = _choose_tiles(C, n)
    n_pad = M * LANE
    pad = n_pad - n

    def prep_k(a):   # (SX, SYH) -> (M, 128), lane-dense
        return jnp.pad(a.reshape(-1), (0, pad)).reshape(M, LANE)

    def prep_x(a):   # (C, SX, SYH) -> (C, M, 128), lane-dense
        return jnp.pad(a.reshape(C, -1), ((0, 0), (0, pad))).reshape(C, M, LANE)

    kr2, ki2 = prep_k(kr), prep_k(ki)
    xr2, xi2 = prep_x(xr), prep_x(xi)

    # Grid: m outer, channel inner -> kr/ki tile reused (no re-DMA) across the
    # inner channel steps; both axes independent -> "parallel" for v7x megacore.
    kspec = pl.BlockSpec((tm, LANE), lambda m, c: (m, 0))
    xspec = pl.BlockSpec((cb, tm, LANE), lambda m, c: (c, m, 0))

    tile_bytes = tm * LANE * 4
    needed = 2 * (2 + 4 * cb) * tile_bytes
    vmem_limit = min(max(32 * 1024 * 1024, needed + (8 << 20)), 48 * 1024 * 1024)

    pr, pi = pl.pallas_call(
        _cmul_kernel,
        out_shape=(
            jax.ShapeDtypeStruct((C, M, LANE), jnp.float32),
            jax.ShapeDtypeStruct((C, M, LANE), jnp.float32),
        ),
        grid=(nb_m, nb_c),
        in_specs=[kspec, kspec, xspec, xspec],
        out_specs=(xspec, xspec),
        input_output_aliases={2: 0, 3: 1},       # xr -> pr, xi -> pi
        compiler_params=pltpu.CompilerParams(
            dimension_semantics=("parallel", "parallel"),
            vmem_limit_bytes=vmem_limit),
    )(kr2, ki2, xr2, xi2)

    out_r = pr.reshape(C, n_pad)[:, :n].reshape(C, SX, SYH)
    out_i = pi.reshape(C, n_pad)[:, :n].reshape(C, SX, SYH)
    return out_r, out_i


# ----------------------------------------------------------------------------
# Module glue
# ----------------------------------------------------------------------------
def ker_c(x, a, w, b):
    return (b * jnp.exp(-(((x[..., None] - a) / w) ** 2) / 2.0)).sum(-1)


@jax.jit
def _forward_impl(kr, ki, X_fft):
    """X_fft: (1, C, SX, SY) complex64 — full two-sided spectrum of a REAL state.

    NOTE: the one-sided irfft2 path assumes X_fft is Hermitian (spectrum of a
    real signal), exactly as in the reference module's usage.
    """
    C, SX, SY = X_fft.shape[1], X_fft.shape[2], X_fft.shape[3]
    SYH = SY // 2 + 1
    xh = X_fft[0, :, :, :SYH]                          # one-sided half spectrum
    xr = jnp.real(xh).astype(jnp.float32)              # fuses under jit
    xi = jnp.imag(xh).astype(jnp.float32)
    pr, pi = complex_mult_pallas(kr, ki, xr, xi)       # (C, SX, SYH)
    half = jax.lax.complex(pr, pi)
    # TODO(synk): inverse FFT has no Pallas primitive; computed with XLA's irfft2.
    pot = jnp.fft.irfft2(half, s=(SX, SY), axes=(-2, -1))
    return pot                                          # (C, SX, SY)


class KernelJax:
    def __init__(self, a, b, w, r, h, config):
        self.a = a
        self.b = b
        self.w = w
        self.r = r
        self.h = h          # unused in forward (kept for parity with the module)
        self.config = config
        self.compute_kernel()

    @property
    def SX(self): return self.config["SX"]
    @property
    def SY(self): return self.config["SY"]
    @property
    def R(self): return self.config["R"]

    def compute_kernel(self):
        x = jnp.arange(self.SX)
        y = jnp.arange(self.SY)
        xx = jnp.tile(x[:, None], (1, self.SY))
        yy = jnp.tile(y[None, :], (self.SX, 1))
        X = (xx - int(self.SX / 2)).astype(jnp.float32)
        Y = (yy - int(self.SY / 2)).astype(jnp.float32)
        D = jnp.sqrt(X ** 2 + Y ** 2) / ((self.R + 15) * self.r)
        kernel = jax.nn.sigmoid(-(D - 1.0) * 10.0) * ker_c(D, self.a, self.w, self.b)
        kernel = kernel / jnp.sum(kernel)                       # (SX, SY)
        # Fold the post-IFFT spatial roll into the kernel:
        #   roll(kernel ⊛ x, -n) == roll(kernel, -n) ⊛ x
        kernel = jnp.roll(
            kernel, shift=(-(self.SX // 2), -(self.SY // 2)), axis=(0, 1))
        # TODO(synk): FFT has no Pallas primitive; computed with XLA's rfft2.
        kfft = jnp.fft.rfft2(kernel)                            # one-sided spectrum
        self.kernel_real = jnp.real(kfft).astype(jnp.float32)   # (SX, SY//2+1)
        self.kernel_imag = jnp.imag(kfft).astype(jnp.float32)

    def forward(self, X_fft):
        return _forward_impl(self.kernel_real, self.kernel_imag, X_fft)


if __name__ == "__main__":
    # small, deterministic setup
    SX, SY, C = 32, 32, 4
    config = {"SX": SX, "SY": SY, "T": 10.0, "R": 13, "device": None}

    a = jnp.array([0.25, 0.50, 0.75], dtype=jnp.float32)   # gaussian centers
    b = jnp.array([1.00, 0.70, 0.30], dtype=jnp.float32)   # gaussian heights
    w = jnp.array([0.10, 0.10, 0.10], dtype=jnp.float32)   # gaussian widths
    r = jnp.float32(1.0)
    h = jnp.float32(1.0)

    mod = KernelJax(a, b, w, r, h, config)

    key = jax.random.PRNGKey(0)
    X = jax.random.uniform(key, (1, C, SX, SY), dtype=jnp.float32)
    X_fft = jnp.fft.fft2(X, axes=(-2, -1))                  # (1, C, SX, SY) complex

    pot = mod.forward(X_fft)
    pot = jax.block_until_ready(pot)

    # reference: ORIGINAL formulation (un-rolled kernel spectrum, full ifft2,
    # explicit post-IFFT roll) — verifies the roll-fold, the half-spectrum
    # multiply, and the irfft2 path.
    xg = jnp.arange(SX); yg = jnp.arange(SY)
    XX = (jnp.tile(xg[:, None], (1, SY)) - SX // 2).astype(jnp.float32)
    YY = (jnp.tile(yg[None, :], (SX, 1)) - SY // 2).astype(jnp.float32)
    D = jnp.sqrt(XX ** 2 + YY ** 2) / ((config["R"] + 15) * r)
    kern = jax.nn.sigmoid(-(D - 1.0) * 10.0) * ker_c(D, a, w, b)
    kern = kern / jnp.sum(kern)
    kfft = jnp.fft.fft2(kern)
    ref = jnp.real(jnp.fft.ifft2(kfft[None, :, :] * X_fft[0], axes=(-2, -1)))
    ref = jnp.roll(ref, shift=(-(SX // 2), -(SY // 2)), axis=(-2, -1))

    assert pot.shape == (C, SX, SY)
    assert jnp.max(jnp.abs(pot - ref)) < 1e-4

    print("KERNEL_OK")
</pallas_src>

<mosaic_0001>
module attributes {stable_mosaic.version = 11 : i64} {
  func.func @_cmul_kernel(%arg0: i32, %arg1: i32, %arg2: memref<5x128xf32, #tpu.memory_space<vmem>>, %arg3: memref<5x128xf32, #tpu.memory_space<vmem>>, %arg4: memref<4x5x128xf32, #tpu.memory_space<vmem>>, %arg5: memref<4x5x128xf32, #tpu.memory_space<vmem>>, %arg6: memref<4x5x128xf32, #tpu.memory_space<vmem>>, %arg7: memref<4x5x128xf32, #tpu.memory_space<vmem>>) attributes {dimension_semantics = [#tpu.dimension_semantics<parallel>, #tpu.dimension_semantics<parallel>], iteration_bounds = array<i64: 1, 1>, scalar_prefetch = 0 : i64, scratch_operands = 0 : i64, tpu.core_type = #tpu.core_type<tc>, window_params = [{transform_indices = @transform_0, window_bounds = array<i64: 5, 128>}, {transform_indices = @transform_1, window_bounds = array<i64: 5, 128>}, {transform_indices = @transform_2, window_bounds = array<i64: 4, 5, 128>}, {transform_indices = @transform_3, window_bounds = array<i64: 4, 5, 128>}, {transform_indices = @transform_4, window_bounds = array<i64: 4, 5, 128>}, {transform_indices = @transform_5, window_bounds = array<i64: 4, 5, 128>}]} {
    %c0 = arith.constant 0 : index
    %c0_0 = arith.constant 0 : index
    %0 = vector.load %arg2[%c0, %c0_0] : memref<5x128xf32, #tpu.memory_space<vmem>>, vector<5x128xf32>
    %c0_1 = arith.constant 0 : index
    %c0_2 = arith.constant 0 : index
    %1 = vector.load %arg3[%c0_1, %c0_2] : memref<5x128xf32, #tpu.memory_space<vmem>>, vector<5x128xf32>
    %c0_3 = arith.constant 0 : index
    %c0_4 = arith.constant 0 : index
    %c0_5 = arith.constant 0 : index
    %2 = vector.load %arg4[%c0_3, %c0_4, %c0_5] : memref<4x5x128xf32, #tpu.memory_space<vmem>>, vector<4x5x128xf32>
    %c0_6 = arith.constant 0 : index
    %c0_7 = arith.constant 0 : index
    %c0_8 = arith.constant 0 : index
    %3 = vector.load %arg5[%c0_6, %c0_7, %c0_8] : memref<4x5x128xf32, #tpu.memory_space<vmem>>, vector<4x5x128xf32>
    %4 = vector.shape_cast %0 : vector<5x128xf32> to vector<1x5x128xf32>
    %5 = vector.broadcast %4 : vector<1x5x128xf32> to vector<4x5x128xf32>
    %6 = arith.mulf %5, %2 : vector<4x5x128xf32>
    %7 = vector.shape_cast %1 : vector<5x128xf32> to vector<1x5x128xf32>
    %8 = vector.broadcast %7 : vector<1x5x128xf32> to vector<4x5x128xf32>
    %9 = arith.mulf %8, %3 : vector<4x5x128xf32>
    %10 = arith.subf %6, %9 : vector<4x5x128xf32>
    %c0_9 = arith.constant 0 : index
    %c0_10 = arith.constant 0 : index
    %c0_11 = arith.constant 0 : index
    %11 = vector.load %arg6[%c0_9, %c0_10, %c0_11] : memref<4x5x128xf32, #tpu.memory_space<vmem>>, vector<4x5x128xf32>
    tpu.vector_store %arg6[%c0_9, %c0_10, %c0_11], %10 {strides = array<i32>} : memref<4x5x128xf32, #tpu.memory_space<vmem>>, vector<4x5x128xf32>,
    %12 = vector.shape_cast %0 : vector<5x128xf32> to vector<1x5x128xf32>
    %13 = vector.broadcast %12 : vector<1x5x128xf32> to vector<4x5x128xf32>
    %14 = arith.mulf %13, %3 : vector<4x5x128xf32>
    %15 = vector.shape_cast %1 : vector<5x128xf32> to vector<1x5x128xf32>
    %16 = vector.broadcast %15 : vector<1x5x128xf32> to vector<4x5x128xf32>
    %17 = arith.mulf %16, %2 : vector<4x5x128xf32>
    %18 = arith.addf %14, %17 : vector<4x5x128xf32>
    %c0_12 = arith.constant 0 : index
    %c0_13 = arith.constant 0 : index
    %c0_14 = arith.constant 0 : index
    %19 = vector.load %arg7[%c0_12, %c0_13, %c0_14] : memref<4x5x128xf32, #tpu.memory_space<vmem>>, vector<4x5x128xf32>
    tpu.vector_store %arg7[%c0_12, %c0_13, %c0_14], %18 {strides = array<i32>} : memref<4x5x128xf32, #tpu.memory_space<vmem>>, vector<4x5x128xf32>,
    return
  }
  func.func @transform_0(%arg0: i32, %arg1: i32) -> (i32, i32) {
    %c0_i32 = arith.constant 0 : i32
    %c0_i32_0 = arith.constant 0 : i32
    return %arg0, %c0_i32 : i32, i32
  }
  func.func @transform_1(%arg0: i32, %arg1: i32) -> (i32, i32) {
    %c0_i32 = arith.constant 0 : i32
    %c0_i32_0 = arith.constant 0 : i32
    return %arg0, %c0_i32 : i32, i32
  }
  func.func @transform_2(%arg0: i32, %arg1: i32) -> (i32, i32, i32) {
    %c0_i32 = arith.constant 0 : i32
    %c0_i32_0 = arith.constant 0 : i32
    return %arg1, %arg0, %c0_i32 : i32, i32, i32
  }
  func.func @transform_3(%arg0: i32, %arg1: i32) -> (i32, i32, i32) {
    %c0_i32 = arith.constant 0 : i32
    %c0_i32_0 = arith.constant 0 : i32
    return %arg1, %arg0, %c0_i32 : i32, i32, i32
  }
  func.func @transform_4(%arg0: i32, %arg1: i32) -> (i32, i32, i32) {
    %c0_i32 = arith.constant 0 : i32
    %c0_i32_0 = arith.constant 0 : i32
    return %arg1, %arg0, %c0_i32 : i32, i32, i32
  }
  func.func @transform_5(%arg0: i32, %arg1: i32) -> (i32, i32, i32) {
    %c0_i32 = arith.constant 0 : i32
    %c0_i32_0 = arith.constant 0 : i32
    return %arg1, %arg0, %c0_i32 : i32, i32, i32
  }
}

</mosaic_0001>

<llo_original>
// kernel: custom-call.1
$region0: #{custom-call.1}
  %s0 = inlined_call_operand.hbm [shape: c64[1,4,32,32], index: 0, kind: input, shape index: {}]
  %s1 = inlined_call_operand.vmem [shape: f32[1,4,32,32], index: 1, kind: output, shape index: {}]
  %s2 = scalar_lea.hbm %s0, 2048
  $region1: #{custom-call.1} parent=0
    #allocation0 [shape = 's32[1]{0}', space=sflag, size = 0x4, scoped, tag = 'scoped memory for custom-call.1']
    %3 = vsyncpa [#allocation0], 0
    %s4 = sshll.u32 %s1, 4
    %s5 = int_to_ptr.vmem [resolvable:$true] %s4
    %7 = dma.hbm_to_vmem [thread:$0]  %s2, 2048, %s5, [#allocation0]
    %8 = dma.done [#allocation0], 2048
    %9 = vsyncpa [#allocation0], 1

// kernel: custom-call
$region0: #{custom-call}
  %s0 = inlined_call_operand.hbm [shape: c64[1,4,32,32], index: 0, kind: input, shape index: {}]
  %s1 = inlined_call_operand.vmem [shape: f32[1,4,32,32], index: 1, kind: output, shape index: {}]
  $region1: #{custom-call} parent=0
    #allocation0 [shape = 's32[1]{0}', space=sflag, size = 0x4, scoped, tag = 'scoped memory for custom-call']
    %2 = vsyncpa [#allocation0], 0
    %s3 = sshll.u32 %s1, 4
    %s4 = int_to_ptr.vmem [resolvable:$true] %s3
    %6 = dma.hbm_to_vmem [thread:$0]  %s0, 2048, %s4, [#allocation0]
    %7 = dma.done [#allocation0], 2048
    %8 = vsyncpa [#allocation0], 1

// kernel: reverse.1
$region0: #{reverse.1}
  %s0 = inlined_call_operand.vmem [shape: f32[4,32,15], index: 0, kind: input, shape index: {}]
  %s1 = inlined_call_operand.vmem [shape: f32[4,32,15], index: 1, kind: output, shape index: {}]
  $region1: #{reverse.1} parent=0
    #allocation0 [shape = 'u8[49152]{0}', space=vmem, size = 0xc000, scoped, tag = 'operand span for operand 0']
    #allocation1 [shape = 'u8[32768]{0}', space=vmem, size = 0x8000, scoped, tag = 'operand span for operand 1']
    %s2 = scalar_lea.vmem [#allocation0], 8
    // Predicated region
    $region2: #{reverse.1} parent=1 // pred_check
      _
    $region3: #{reverse.1} parent=1 // pred_check_branch
      %4 = sbr.rel (0) target = $region5
    $region4: #{reverse.1} parent=1 // pred_region
      // Predicated region
      $region6: #{reverse.1} parent=4 // pred_check
        _
      $region7: #{reverse.1} parent=4 // pred_check_branch
        %6 = sbr.rel (0) target = $region9
      $region8: #{reverse.1} parent=4 // pred_region
        // Predicated region
        $region21: #{reverse.1} parent=8 // pred_check
          _
        $region22: #{reverse.1} parent=8 // pred_check_branch
          %35 = sbr.rel (0) target = $region24
        $region23: #{reverse.1} parent=8 // pred_region
          loop: start=0, step=1, limit=1
          $region25: #{reverse.1} parent=23 // loop_pre_header
            _
          $region26: #{reverse.1} parent=23 // loop_header
            %s37 = sphi 0, %s41
            %p38 = scmp.ge.s32.totalorder %s37, 1
            %s42 = sphi %s0, %s0
            %s43 = sphi %s2, %s2
          $region27: #{reverse.1} parent=23 // loop_header_branch
            %40 = sbr.rel (%p38) target = $region31
          $region28: #{reverse.1} parent=23 // loop_body
            %v44 = vld [vmem:[%s42] sm:$0xff]
            %45 = vst [vmem:[%s43] sm:$0xff] %v44
            %v46 = vld [vmem:[%s42 + $0x8] sm:$0xff]
            %47 = vst [vmem:[%s43 + $0x8] sm:$0xff] %v46
            %v48 = vld [vmem:[%s42 + $0x10] sm:$0xff]
            %49 = vst [vmem:[%s43 + $0x18] sm:$0xff] %v48
            %v50 = vld [vmem:[%s42 + $0x18] sm:$0xff]
            %51 = vst [vmem:[%s43 + $0x20] sm:$0xff] %v50
            %v52 = vld [vmem:[%s42 + $0x20] sm:$0xff]
            %53 = vst [vmem:[%s43 + $0x30] sm:$0xff] %v52
            %v54 = vld [vmem:[%s42 + $0x28] sm:$0xff]
            %55 = vst [vmem:[%s43 + $0x38] sm:$0xff] %v54
            %v56 = vld [vmem:[%s42 + $0x30] sm:$0xff]
            %57 = vst [vmem:[%s43 + $0x48] sm:$0xff] %v56
            %v58 = vld [vmem:[%s42 + $0x38] sm:$0xff]
            %59 = vst [vmem:[%s43 + $0x50] sm:$0xff] %v58
          $region29: #{reverse.1} parent=23 // loop_footer
            %s41 = sadd.s32 1, %s37
          $region30: #{reverse.1} parent=23 // loop_footer_branch
            %36 = sbr.rel target = $region26
          $region31: #{reverse.1} parent=23 // loop_exit
            _
        $region24: #{reverse.1} parent=8 // pred_fallthru
          _
        // Predicated region
        $region32: #{reverse.1} parent=8 // pred_check
          _
        $region33: #{reverse.1} parent=8 // pred_check_branch
          %61 = sbr.rel target = $region35
        $region34: #{reverse.1} parent=8 // pred_region
          _
        $region35: #{reverse.1} parent=8 // pred_fallthru
          _
      $region9: #{reverse.1} parent=4 // pred_fallthru
        _
      // Predicated region
      $region10: #{reverse.1} parent=4 // pred_check
        _
      $region11: #{reverse.1} parent=4 // pred_check_branch
        %8 = sbr.rel target = $region13
      $region12: #{reverse.1} parent=4 // pred_region
        loop: start=0, step=1, limit=1
        $region14: #{reverse.1} parent=12 // loop_pre_header
          _
        $region15: #{reverse.1} parent=12 // loop_header
          %s11 = sphi 0, %s15
          %p12 = scmp.ge.s32.totalorder %s11, 1
          %s16 = sphi %s0, %s0
          %s17 = sphi %s2, %s2
        $region16: #{reverse.1} parent=12 // loop_header_branch
          %14 = sbr.rel (%p12) target = $region20
        $region17: #{reverse.1} parent=12 // loop_body
          %v18 = vld [vmem:[%s16] sm:$0xff]
          %19 = vst [vmem:[%s17] sm:$0xff] %v18
          %v20 = vld [vmem:[%s16 + $0x8] sm:$0xff]
          %21 = vst [vmem:[%s17 + $0x8] sm:$0xff] %v20
          %v22 = vld [vmem:[%s16 + $0x10] sm:$0xff]
          %23 = vst [vmem:[%s17 + $0x18] sm:$0xff] %v22
          %v24 = vld [vmem:[%s16 + $0x18] sm:$0xff]
          %25 = vst [vmem:[%s17 + $0x20] sm:$0xff] %v24
          %v26 = vld [vmem:[%s16 + $0x20] sm:$0xff]
          %27 = vst [vmem:[%s17 + $0x30] sm:$0xff] %v26
          %v28 = vld [vmem:[%s16 + $0x28] sm:$0xff]
          %29 = vst [vmem:[%s17 + $0x38] sm:$0xff] %v28
          %v30 = vld [vmem:[%s16 + $0x30] sm:$0xff]
          %31 = vst [vmem:[%s17 + $0x48] sm:$0xff] %v30
          %v32 = vld [vmem:[%s16 + $0x38] sm:$0xff]
          %33 = vst [vmem:[%s17 + $0x50] sm:$0xff] %v32
        $region18: #{reverse.1} parent=12 // loop_footer
          %s15 = sadd.s32 1, %s11
        $region19: #{reverse.1} parent=12 // loop_footer_branch
          %10 = sbr.rel target = $region15
        $region20: #{reverse.1} parent=12 // loop_exit
          _
      $region13: #{reverse.1} parent=4 // pred_fallthru
        _
    $region5: #{reverse.1} parent=1 // pred_fallthru
      _
    %62 = vnop
    %s63 = scalar_lea.vmem [#allocation0], 8
    %s64 = scalar_lea.vmem %s63, 7 [#allocation0]
    %v65 = vld [vmem:[%s64] ss:$-1 sm:$0xff]
    %v66 = vrot.slane %v65, 1
    %67 = vst [vmem:[#allocation1] sm:$0xff] %v66
    %s68 = scalar_lea.vmem [#allocation0], 16
    %s69 = scalar_lea.vmem %s68, 7 [#allocation0]
    %v70 = vld [vmem:[%s69] ss:$-1 sm:$0xff]
    %v71 = vrot.slane %v70, 1
    %v72 = vlaneseq
    %v73 = vshrl.u32 %v72, 7
    %vm74 = vcmp.lt.s32.totalorder %v73, 7
    %75 = vst.msk [vmem:[#allocation1] sm:$0xff] %vm74, %v71
    %s76 = scalar_lea.vmem [#allocation1], 8
    %s77 = scalar_lea.vmem [#allocation0], 7
    %v78 = vld [vmem:[%s77] ss:$-1 sm:$0xff]
    %v79 = vrot.slane %v78, 1
    %80 = vst [vmem:[%s76] sm:$0xff] %v79
    %s81 = scalar_lea.vmem [#allocation0], 8
    %s82 = scalar_lea.vmem %s81, 7 [#allocation0]
    %v83 = vld [vmem:[%s82] ss:$-1 sm:$0xff]
    %v84 = vrot.slane %v83, 1
    %v85 = vlaneseq
    %v86 = vshrl.u32 %v85, 7
    %vm87 = vcmp.lt.s32.totalorder %v86, 7
    %88 = vst.msk [vmem:[%s76] sm:$0xff] %vm87, %v84
    %s89 = scalar_lea.vmem [#allocation1], 16
    %s90 = scalar_lea.vmem [#allocation0], 24
    %s91 = scalar_lea.vmem %s90, 8 [#allocation0]
    %s92 = scalar_lea.vmem %s91, 7 [#allocation0]
    %v93 = vld [vmem:[%s92] ss:$-1 sm:$0xff]
    %v94 = vrot.slane %v93, 1
    %95 = vst [vmem:[%s89] sm:$0xff] %v94
    %s96 = scalar_lea.vmem %s90, 16 [#allocation0]
    %s97 = scalar_lea.vmem %s96, 7 [#allocation0]
    %v98 = vld [vmem:[%s97] ss:$-1 sm:$0xff]
    %v99 = vrot.slane %v98, 1
    %v100 = vlaneseq
    %v101 = vshrl.u32 %v100, 7
    %vm102 = vcmp.lt.s32.totalorder %v101, 7
    %103 = vst.msk [vmem:[%s89] sm:$0xff] %vm102, %v99
    %s104 = scalar_lea.vmem %s89, 8 [#allocation1]
    %s105 = scalar_lea.vmem %s90, 7 [#allocation0]
    %v106 = vld [vmem:[%s105] ss:$-1 sm:$0xff]
    %v107 = vrot.slane %v106, 1
    %108 = vst [vmem:[%s104] sm:$0xff] %v107
    %s109 = scalar_lea.vmem %s90, 8 [#allocation0]
    %s110 = scalar_lea.vmem %s109, 7 [#allocation0]
    %v111 = vld [vmem:[%s110] ss:$-1 sm:$0xff]
    %v112 = vrot.slane %v111, 1
    %v113 = vlaneseq
    %v114 = vshrl.u32 %v113, 7
    %vm115 = vcmp.lt.s32.totalorder %v114, 7
    %116 = vst.msk [vmem:[%s104] sm:$0xff] %vm115, %v112
    %s117 = scalar_lea.vmem [#allocation1], 32
    %s118 = scalar_lea.vmem [#allocation0], 48
    %s119 = scalar_lea.vmem %s118, 8 [#allocation0]
    %s120 = scalar_lea.vmem %s119, 7 [#allocation0]
    %v121 = vld [vmem:[%s120] ss:$-1 sm:$0xff]
    %v122 = vrot.slane %v121, 1
    %123 = vst [vmem:[%s117] sm:$0xff] %v122
    %s124 = scalar_lea.vmem %s118, 16 [#allocation0]
    %s125 = scalar_lea.vmem %s124, 7 [#allocation0]
    %v126 = vld [vmem:[%s125] ss:$-1 sm:$0xff]
    %v127 = vrot.slane %v126, 1
    %v128 = vlaneseq
    %v129 = vshrl.u32 %v128, 7
    %vm130 = vcmp.lt.s32.totalorder %v129, 7
    %131 = vst.msk [vmem:[%s117] sm:$0xff] %vm130, %v127
    %s132 = scalar_lea.vmem %s117, 8 [#allocation1]
    %s133 = scalar_lea.vmem %s118, 7 [#allocation0]
    %v134 = vld [vmem:[%s133] ss:$-1 sm:$0xff]
    %v135 = vrot.slane %v134, 1
    %136 = vst [vmem:[%s132] sm:$0xff] %v135
    %s137 = scalar_lea.vmem %s118, 8 [#allocation0]
    %s138 = scalar_lea.vmem %s137, 7 [#allocation0]
    %v139 = vld [vmem:[%s138] ss:$-1 sm:$0xff]
    %v140 = vrot.slane %v139, 1
    %v141 = vlaneseq
    %v142 = vshrl.u32 %v141, 7
    %vm143 = vcmp.lt.s32.totalorder %v142, 7
    %144 = vst.msk [vmem:[%s132] sm:$0xff] %vm143, %v140
    %s145 = scalar_lea.vmem [#allocation1], 48
    %s146 = scalar_lea.vmem [#allocation0], 72
    %s147 = scalar_lea.vmem %s146, 8 [#allocation0]
    %s148 = scalar_lea.vmem %s147, 7 [#allocation0]
    %v149 = vld [vmem:[%s148] ss:$-1 sm:$0xff]
    %v150 = vrot.slane %v149, 1
    %151 = vst [vmem:[%s145] sm:$0xff] %v150
    %s152 = scalar_lea.vmem %s146, 16 [#allocation0]
    %s153 = scalar_lea.vmem %s152, 7 [#allocation0]
    %v154 = vld [vmem:[%s153] ss:$-1 sm:$0xff]
    %v155 = vrot.slane %v154, 1
    %v156 = vlaneseq
    %v157 = vshrl.u32 %v156, 7
    %vm158 = vcmp.lt.s32.totalorder %v157, 7
    %159 = vst.msk [vmem:[%s145] sm:$0xff] %vm158, %v155
    %s160 = scalar_lea.vmem %s145, 8 [#allocation1]
    %s161 = scalar_lea.vmem %s146, 7 [#allocation0]
    %v162 = vld [vmem:[%s161] ss:$-1 sm:$0xff]
    %v163 = vrot.slane %v162, 1
    %164 = vst [vmem:[%s160] sm:$0xff] %v163
    %s165 = scalar_lea.vmem %s146, 8 [#allocation0]
    %s166 = scalar_lea.vmem %s165, 7 [#allocation0]
    %v167 = vld [vmem:[%s166] ss:$-1 sm:$0xff]
    %v168 = vrot.slane %v167, 1
    %v169 = vlaneseq
    %v170 = vshrl.u32 %v169, 7
    %vm171 = vcmp.lt.s32.totalorder %v170, 7
    %172 = vst.msk [vmem:[%s160] sm:$0xff] %vm171, %v168
    // Predicated region
    $region36: #{reverse.1} parent=1 // pred_check
      _
    $region37: #{reverse.1} parent=1 // pred_check_branch
      %174 = sbr.rel (0) target = $region39
    $region38: #{reverse.1} parent=1 // pred_region
      // Predicated region
      $region40: #{reverse.1} parent=38 // pred_check
        _
      $region41: #{reverse.1} parent=38 // pred_check_branch
        %176 = sbr.rel (0) target = $region43
      $region42: #{reverse.1} parent=38 // pred_region
        // Predicated region
        $region55: #{reverse.1} parent=42 // pred_check
          _
        $region56: #{reverse.1} parent=42 // pred_check_branch
          %205 = sbr.rel (0) target = $region58
        $region57: #{reverse.1} parent=42 // pred_region
          loop: start=0, step=1, limit=1
          $region59: #{reverse.1} parent=57 // loop_pre_header
            _
          $region60: #{reverse.1} parent=57 // loop_header
            %s207 = sphi 0, %s211
            %p208 = scmp.ge.s32.totalorder %s207, 1
            %s212 = sphi [#allocation1], [#allocation1]
            %s213 = sphi %s1, %s1
          $region61: #{reverse.1} parent=57 // loop_header_branch
            %210 = sbr.rel (%p208) target = $region65
          $region62: #{reverse.1} parent=57 // loop_body
            %v214 = vld [vmem:[%s212] sm:$0xff]
            %215 = vst [vmem:[%s213] sm:$0xff] %v214
            %v216 = vld [vmem:[%s212 + $0x8] sm:$0xff]
            %217 = vst [vmem:[%s213 + $0x8] sm:$0xff] %v216
            %v218 = vld [vmem:[%s212 + $0x10] sm:$0xff]
            %219 = vst [vmem:[%s213 + $0x10] sm:$0xff] %v218
            %v220 = vld [vmem:[%s212 + $0x18] sm:$0xff]
            %221 = vst [vmem:[%s213 + $0x18] sm:$0xff] %v220
            %v222 = vld [vmem:[%s212 + $0x20] sm:$0xff]
            %223 = vst [vmem:[%s213 + $0x20] sm:$0xff] %v222
            %v224 = vld [vmem:[%s212 + $0x28] sm:$0xff]
            %225 = vst [vmem:[%s213 + $0x28] sm:$0xff] %v224
            %v226 = vld [vmem:[%s212 + $0x30] sm:$0xff]
            %227 = vst [vmem:[%s213 + $0x30] sm:$0xff] %v226
            %v228 = vld [vmem:[%s212 + $0x38] sm:$0xff]
            %229 = vst [vmem:[%s213 + $0x38] sm:$0xff] %v228
          $region63: #{reverse.1} parent=57 // loop_footer
            %s211 = sadd.s32 1, %s207
          $region64: #{reverse.1} parent=57 // loop_footer_branch
            %206 = sbr.rel target = $region60
          $region65: #{reverse.1} parent=57 // loop_exit
            _
        $region58: #{reverse.1} parent=42 // pred_fallthru
          _
        // Predicated region
        $region66: #{reverse.1} parent=42 // pred_check
          _
        $region67: #{reverse.1} parent=42 // pred_check_branch
          %231 = sbr.rel target = $region69
        $region68: #{reverse.1} parent=42 // pred_region
          _
        $region69: #{reverse.1} parent=42 // pred_fallthru
          _
      $region43: #{reverse.1} parent=38 // pred_fallthru
        _
      // Predicated region
      $region44: #{reverse.1} parent=38 // pred_check
        _
      $region45: #{reverse.1} parent=38 // pred_check_branch
        %178 = sbr.rel target = $region47
      $region46: #{reverse.1} parent=38 // pred_region
        loop: start=0, step=1, limit=1
        $region48: #{reverse.1} parent=46 // loop_pre_header
          _
        $region49: #{reverse.1} parent=46 // loop_header
          %s181 = sphi 0, %s185
          %p182 = scmp.ge.s32.totalorder %s181, 1
          %s186 = sphi [#allocation1], [#allocation1]
          %s187 = sphi %s1, %s1
        $region50: #{reverse.1} parent=46 // loop_header_branch
          %184 = sbr.rel (%p182) target = $region54
        $region51: #{reverse.1} parent=46 // loop_body
          %v188 = vld [vmem:[%s186] sm:$0xff]
          %189 = vst [vmem:[%s187] sm:$0xff] %v188
          %v190 = vld [vmem:[%s186 + $0x8] sm:$0xff]
          %191 = vst [vmem:[%s187 + $0x8] sm:$0xff] %v190
          %v192 = vld [vmem:[%s186 + $0x10] sm:$0xff]
          %193 = vst [vmem:[%s187 + $0x10] sm:$0xff] %v192
          %v194 = vld [vmem:[%s186 + $0x18] sm:$0xff]
          %195 = vst [vmem:[%s187 + $0x18] sm:$0xff] %v194
          %v196 = vld [vmem:[%s186 + $0x20] sm:$0xff]
          %197 = vst [vmem:[%s187 + $0x20] sm:$0xff] %v196
          %v198 = vld [vmem:[%s186 + $0x28] sm:$0xff]
          %199 = vst [vmem:[%s187 + $0x28] sm:$0xff] %v198
          %v200 = vld [vmem:[%s186 + $0x30] sm:$0xff]
          %201 = vst [vmem:[%s187 + $0x30] sm:$0xff] %v200
          %v202 = vld [vmem:[%s186 + $0x38] sm:$0xff]
          %203 = vst [vmem:[%s187 + $0x38] sm:$0xff] %v202
        $region52: #{reverse.1} parent=46 // loop_footer
          %s185 = sadd.s32 1, %s181
        $region53: #{reverse.1} parent=46 // loop_footer_branch
          %180 = sbr.rel target = $region49
        $region54: #{reverse.1} parent=46 // loop_exit
          _
      $region47: #{reverse.1} parent=38 // pred_fallthru
        _
    $region39: #{reverse.1} parent=1 // pred_fallthru
      _
    %232 = vnop

// kernel: _forward_impl.1
$region0: #{_forward_impl.1}
  #allocation0 [shape = 'u32[]', space=smem, size = 0x4, offset = 0x4, fixed_abs, tag = 'smem constant byte address 0x4 - core index']
  #allocation1 [shape = 'u32[144,128]{1,0:T(1,128)}', space=vmem, size = 0x12000, scoped, tag = 'internal scratch']
  %s0 = inlined_call_operand.vmem [shape: f32[5,128], index: 0, kind: input, shape index: {}]
  %s1 = inlined_call_operand.vmem [shape: f32[5,128], index: 1, kind: input, shape index: {}]
  %s2 = inlined_call_operand.vmem [shape: f32[4,5,128], index: 2, kind: input, shape index: {}, may-alias: {2,4}]
  %s3 = inlined_call_operand.vmem [shape: f32[4,5,128], index: 3, kind: input, shape index: {}, may-alias: {3,5}]
  %s4 = inlined_call_operand.vmem [shape: f32[4,5,128], index: 4, kind: output, shape index: {0}, may-alias: {2,4}]
  %s5 = inlined_call_operand.vmem [shape: f32[4,5,128], index: 5, kind: output, shape index: {1}, may-alias: {3,5}]
  %6 = xla_tuple %s4, %s5
  %s7 = sld [smem:[#allocation0]]
  $region34: #{_forward_impl.1} parent=0
    _
  %s9 = ssub.s32 1, %s7
  %s10 = scalar_select 0, %s9, %s7
  // Predicated region
  $region2: #{_forward_impl.1} parent=0 // pred_check
    _
  $region3: #{_forward_impl.1} parent=0 // pred_check_branch
    %12 = sbr.rel (0) target = $region5
  $region4: #{_forward_impl.1} parent=0 // pred_region
    _
  $region5: #{_forward_impl.1} parent=0 // pred_fallthru
    _
  // Predicated region
  $region6: #{_forward_impl.1} parent=0 // pred_check
    _
  $region7: #{_forward_impl.1} parent=0 // pred_check_branch
    %14 = sbr.rel (0) target = $region9
  $region8: #{_forward_impl.1} parent=0 // pred_region
    _
  $region9: #{_forward_impl.1} parent=0 // pred_fallthru
    _
  // Predicated region
  $region10: #{_forward_impl.1} parent=0 // pred_check
    _
  $region11: #{_forward_impl.1} parent=0 // pred_check_branch
    %16 = sbr.rel (0) target = $region13
  $region12: #{_forward_impl.1} parent=0 // pred_region
    _
  $region13: #{_forward_impl.1} parent=0 // pred_fallthru
    _
  // Predicated region
  $region14: #{_forward_impl.1} parent=0 // pred_check
    _
  $region15: #{_forward_impl.1} parent=0 // pred_check_branch
    %18 = sbr.rel (0) target = $region17
  $region16: #{_forward_impl.1} parent=0 // pred_region
    _
  $region17: #{_forward_impl.1} parent=0 // pred_fallthru
    _
  %v19 = vld [vmem:[%s0] sm:$0x1f]
  %v20 = vld [vmem:[%s1] sm:$0x1f]
  %v21 = vld [vmem:[%s2] sm:$0x1f]
  %v22 = vld [vmem:[%s2 + $0x8] sm:$0x1f]
  %v23 = vld [vmem:[%s2 + $0x10] sm:$0x1f]
  %v24 = vld [vmem:[%s2 + $0x18] sm:$0x1f]
  %v25 = vld [vmem:[%s3] sm:$0x1f]
  %v26 = vld [vmem:[%s3 + $0x8] sm:$0x1f]
  %v27 = vld [vmem:[%s3 + $0x10] sm:$0x1f]
  %v28 = vld [vmem:[%s3 + $0x18] sm:$0x1f]
  %v29 = vmul.f32 %v19, %v21
  %v30 = vmul.f32 %v19, %v22
  %v31 = vmul.f32 %v19, %v23
  %v32 = vmul.f32 %v19, %v24
  %v33 = vmul.f32 %v20, %v25
  %v34 = vmul.f32 %v20, %v26
  %v35 = vmul.f32 %v20, %v27
  %v36 = vmul.f32 %v20, %v28
  %v37 = vsub.f32 %v29, %v33
  %v38 = vsub.f32 %v30, %v34
  %v39 = vsub.f32 %v31, %v35
  %v40 = vsub.f32 %v32, %v36
  %41 = vst [vmem:[%s4] sm:$0x1f] %v37
  %42 = vst [vmem:[%s4 + $0x8] sm:$0x1f] %v38
  %43 = vst [vmem:[%s4 + $0x10] sm:$0x1f] %v39
  %44 = vst [vmem:[%s4 + $0x18] sm:$0x1f] %v40
  %v45 = vmul.f32 %v19, %v25
  %v46 = vmul.f32 %v19, %v26
  %v47 = vmul.f32 %v19, %v27
  %v48 = vmul.f32 %v19, %v28
  %v49 = vmul.f32 %v20, %v21
  %v50 = vmul.f32 %v20, %v22
  %v51 = vmul.f32 %v20, %v23
  %v52 = vmul.f32 %v20, %v24
  %v53 = vadd.f32 %v45, %v49
  %v54 = vadd.f32 %v46, %v50
  %v55 = vadd.f32 %v47, %v51
  %v56 = vadd.f32 %v48, %v52
  %57 = vst [vmem:[%s5] sm:$0x1f] %v53
  %58 = vst [vmem:[%s5 + $0x8] sm:$0x1f] %v54
  %59 = vst [vmem:[%s5 + $0x10] sm:$0x1f] %v55
  %60 = vst [vmem:[%s5 + $0x18] sm:$0x1f] %v56
  // Predicated region
  $region18: #{_forward_impl.1} parent=0 // pred_check
    _
  $region19: #{_forward_impl.1} parent=0 // pred_check_branch
    %62 = sbr.rel (0) target = $region21
  $region20: #{_forward_impl.1} parent=0 // pred_region
    _
  $region21: #{_forward_impl.1} parent=0 // pred_fallthru
    _
  // Predicated region
  $region22: #{_forward_impl.1} parent=0 // pred_check
    _
  $region23: #{_forward_impl.1} parent=0 // pred_check_branch
    %64 = sbr.rel (0) target = $region25
  $region24: #{_forward_impl.1} parent=0 // pred_region
    _
  $region25: #{_forward_impl.1} parent=0 // pred_fallthru
    _
  // Predicated region
  $region26: #{_forward_impl.1} parent=0 // pred_check
    _
  $region27: #{_forward_impl.1} parent=0 // pred_check_branch
    %66 = sbr.rel (0) target = $region29
  $region28: #{_forward_impl.1} parent=0 // pred_region
    _
  $region29: #{_forward_impl.1} parent=0 // pred_fallthru
    _
  // Predicated region
  $region30: #{_forward_impl.1} parent=0 // pred_check
    _
  $region31: #{_forward_impl.1} parent=0 // pred_check_branch
    %68 = sbr.rel (0) target = $region33
  $region32: #{_forward_impl.1} parent=0 // pred_region
    _
  $region33: #{_forward_impl.1} parent=0 // pred_fallthru
    _

</llo_original>
